<compile_context>
chip_gen: v7x
topology: tpu7x:2x2x1
jax: 0.10.0
libtpu: 0.0.40
codegen_flags: <defaults>
</compile_context>

<pallas_src>
import numpy as np
import jax
import jax.numpy as jnp
from jax.experimental import pallas as pl
from jax.experimental.pallas import tpu as pltpu

LANE = 128  # TPU lane width


# ----------------------------------------------------------------------------
# Pallas kernel: fused matmul + bias (the compute core of every conv here)
# ----------------------------------------------------------------------------
def _matmul_bias_kernel(x_ref, w_ref, b_ref, o_ref):
    # f32 MXU accumulate, fused bias epilogue, store in the output dtype
    # (bf16 for intermediate stages -> halves output writeback bytes).
    o_ref[...] = (
        jnp.dot(x_ref[...], w_ref[...], preferred_element_type=jnp.float32)
        + b_ref[...]
    ).astype(o_ref.dtype)


def matmul_bias(x, w, b, *, out_dtype=jnp.float32,
                compute_dtype=jnp.bfloat16, tile_n=512):
    """y = x @ w + b via a Pallas TPU kernel.

    x: (N, K); w: (K, M); b: (M,) -> (N, M) in `out_dtype`.

    Small problems (everything in this toy decoder) run as one block: whole
    operands resident in VMEM, zero per-step pipeline overhead, no padding.
    Large-N problems (production lat/lon) take the row-tiled grid path:
    weight/bias resident, activation/output tiled (tile_n, K)/(tile_n, M)
    with lane-dense stores, dimension_semantics=("parallel",) so both v7x
    TensorCores split the rows, and an explicit VMEM limit derived from the
    tile so the same tile is safe on v7x's 64 MiB VMEM.
    """
    N, K = x.shape
    Kw, M = w.shape
    assert K == Kw, (K, Kw)

    x = x.astype(compute_dtype)
    w = w.astype(compute_dtype)
    b = b.reshape(1, M).astype(jnp.float32)

    in_isz = jnp.dtype(compute_dtype).itemsize
    out_isz = jnp.dtype(out_dtype).itemsize
    cost = pl.CostEstimate(
        flops=2 * N * K * M,
        transcendentals=0,
        bytes_accessed=int(N * K * in_isz + K * M * in_isz + M * 4
                           + N * M * out_isz))

    use_grid = (tile_n > 0 and N % tile_n == 0 and N // tile_n >= 2
                and M % LANE == 0)
    if not use_grid:
        # single block: whole problem in VMEM, one MXU matmul.
        return pl.pallas_call(
            _matmul_bias_kernel,
            out_shape=jax.ShapeDtypeStruct((N, M), out_dtype),
            cost_estimate=cost,
        )(x, w, b)

    # Production row-tiled path.
    grid = (N // tile_n,)
    # double-buffered activation/output tiles + resident (double-buffered to
    # be safe) weight and bias, plus headroom -- explicit so tiles derived
    # here stay within v7x's 64 MiB physical VMEM.
    need = (2 * tile_n * K * in_isz + 2 * tile_n * M * out_isz
            + 2 * K * M * in_isz + 2 * M * 4)
    vmem_limit = int(min(100 * 1024 * 1024,
                         max((need * 4) // 3, 8 * 1024 * 1024)))
    return pl.pallas_call(
        _matmul_bias_kernel,
        out_shape=jax.ShapeDtypeStruct((N, M), out_dtype),
        grid_spec=pltpu.PrefetchScalarGridSpec(
            num_scalar_prefetch=0,
            grid=grid,
            in_specs=[
                pl.BlockSpec((tile_n, K), lambda i: (i, 0)),   # activation tile
                pl.BlockSpec((K, M), lambda i: (0, 0)),        # resident weight
                pl.BlockSpec((1, M), lambda i: (0, 0)),        # resident bias
            ],
            out_specs=pl.BlockSpec((tile_n, M), lambda i: (i, 0)),  # lane dense
        ),
        compiler_params=pltpu.CompilerParams(
            dimension_semantics=("parallel",),
            vmem_limit_bytes=vmem_limit),
        cost_estimate=cost,
    )(x, w, b)


# ----------------------------------------------------------------------------
# Channels-last ConvTranspose (stride == kernel) built on the matmul kernel
# ----------------------------------------------------------------------------
def conv_transpose_nd(x, prep, out_dtype=jnp.bfloat16):
    """ConvTransposeNd, stride == kernel_size, channels-last in and out.

    x: (B, *S, IC)  ->  (B, *(S*k), OC)

    Weight columns are pre-ordered (k..., OC) so the matmul output is already
    channels-last; the post-matmul permutation only interleaves spatial axes
    and never moves the lane (C) axis.
    """
    B = x.shape[0]
    S = tuple(x.shape[1:-1])
    IC = x.shape[-1]
    OC, k = prep['oc'], prep['k']
    n = len(S)

    X = x.reshape(-1, IC)                                   # (B*prod(S), IC)
    Y = matmul_bias(X, prep['Wm'], prep['b'], out_dtype=out_dtype)

    Y = Y.reshape((B,) + S + k + (OC,))
    perm = [0]
    for d in range(n):
        perm += [1 + d, 1 + n + d]
    perm += [1 + 2 * n]                                     # C stays last
    Y = jnp.transpose(Y, perm)
    out_spatial = tuple(S[d] * k[d] for d in range(n))
    return Y.reshape((B,) + out_spatial + (OC,))


# ----------------------------------------------------------------------------
# Numpy helpers used only inside prepare_params (run once, outside jit)
# ----------------------------------------------------------------------------
def _convt_matrices(w, b):
    """PyTorch ConvTransposeNd weight (IC, OC, *k) -> matmul weight (IC, kp*OC)
    with column = flat_k*OC + oc (channels-last column order); bias tiled."""
    w = np.asarray(w, np.float32)
    b = np.asarray(b, np.float32)
    IC, OC = w.shape[0], w.shape[1]
    k = tuple(w.shape[2:])
    kp = int(np.prod(k))
    Wm = np.moveaxis(w, 1, -1).reshape(IC, kp * OC)
    bf = np.tile(b, kp)
    return Wm, bf, OC, k


def _conv2d_patch_np(x, w, b):
    """Conv2d with stride == kernel (patch embed), numpy, channels-last out.
    x: (1, IC, H, W); w: (OC, IC, kh, kw); b: (OC,) -> (1, Hc, Wc, OC)."""
    x = np.asarray(x, np.float32)
    w = np.asarray(w, np.float32)
    b = np.asarray(b, np.float32)
    OC, IC, kh, kw = w.shape
    _, _, H, W = x.shape
    Hc, Wc = H // kh, W // kw
    patches = (x.reshape(1, IC, Hc, kh, Wc, kw)
                 .transpose(0, 2, 4, 1, 3, 5)
                 .reshape(Hc * Wc, IC * kh * kw))
    Y = patches @ w.reshape(OC, IC * kh * kw).T + b
    return Y.reshape(1, Hc, Wc, OC)


def _posemb_sincos_3d_np(f, h, w, dim, temperature=10000):
    z, y, x = np.meshgrid(np.arange(f), np.arange(h), np.arange(w),
                          indexing='ij')
    fourier_dim = dim // 6
    denom = max(fourier_dim - 1, 1)
    omega = np.arange(fourier_dim) / denom
    omega = 1.0 / (temperature ** omega)
    z = z.flatten()[:, None] * omega[None, :]
    y = y.flatten()[:, None] * omega[None, :]
    x = x.flatten()[:, None] * omega[None, :]
    pe = np.concatenate([np.sin(x), np.cos(x), np.sin(y), np.cos(y),
                         np.sin(z), np.cos(z)], axis=1)
    pe = np.pad(pe, ((0, 0), (0, dim - fourier_dim * 6)))
    return pe.astype(np.float32)


def make_diffusion_schedule(T=1000, beta_start=1e-4, beta_end=0.02):
    """The DDPM schedule buffers registered in ForecastStepDiffusion.__init__.
    Pure constants; the sampling loops themselves need the external diffuser."""
    betas = np.linspace(beta_start, beta_end, T, dtype=np.float32)
    alphas = 1.0 - betas
    alphas_cumprod = np.cumprod(alphas)
    return dict(betas=betas, alphas=alphas, alphas_cumprod=alphas_cumprod,
                sqrt_alphas_cumprod=np.sqrt(alphas_cumprod),
                sqrt_one_minus_alphas_cumprod=np.sqrt(1.0 - alphas_cumprod))


# ----------------------------------------------------------------------------
# Parameter preparation: all weight reshapes / constant compute hoisted here
# ----------------------------------------------------------------------------
def prepare_params(params, cfg, compute_dtype=jnp.bfloat16):
    conv_sz = cfg['conv_sz']
    conv_dim = cfg['conv_dim']
    winpad_full = cfg['tr_win'][2] // 2 * 2
    winpad = winpad_full // 2
    n = len(conv_sz)

    # ---- intermediate deconvs (channels-last (k, OC) column order) --------
    deconvs = []
    for p in params['deconvs']:
        Wm, bf, OC, k = _convt_matrices(p['w'], p['b'])
        deconvs.append(dict(Wm=jnp.asarray(Wm, compute_dtype),
                            b=jnp.asarray(bf, jnp.float32),
                            oc=OC, k=k))

    # ---- fused final heads: block-diagonal (pr ++ sfc) single matmul ------
    Wpr, bpr, pr_oc, pr_k = _convt_matrices(params['deconv_pr']['w'],
                                            params['deconv_pr']['b'])
    C0 = conv_dim[0]
    # reorder sfc input channels from PyTorch's (c, level) interleave
    # (x[:, :, -2:].reshape(B, 2C, H, W) in NCDHW) to the channels-last
    # (level, c) feature order produced by the forward pass.
    sfc_perm = np.array([c * 2 + lev for lev in range(2) for c in range(C0)])
    w_sfc = np.asarray(params['deconv_sfc']['w'], np.float32)[sfc_perm]
    Wsf, bsf, sfc_oc, sfc_k = _convt_matrices(w_sfc, params['deconv_sfc']['b'])
    Kc = Wpr.shape[0] + Wsf.shape[0]
    Mc = Wpr.shape[1] + Wsf.shape[1]
    Wcomb = np.zeros((Kc, Mc), np.float32)
    Wcomb[:Wpr.shape[0], :Wpr.shape[1]] = Wpr
    Wcomb[Wpr.shape[0]:, Wpr.shape[1]:] = Wsf
    bcomb = np.concatenate([bpr, bsf])
    heads = dict(Wm=jnp.asarray(Wcomb, compute_dtype),
                 b=jnp.asarray(bcomb, jnp.float32),
                 k_pr=int(Wpr.shape[0]), m_pr=int(Wpr.shape[1]),
                 k_sfc=int(Wsf.shape[0]), m_sfc=int(Wsf.shape[1]),
                 pr_oc=pr_oc, pr_k=pr_k, sfc_oc=sfc_oc, sfc_k=sfc_k)

    # ---- stage-shape trace (mirrors the forward loop) + precomputed PEs ---
    D, H, W = cfg['final_res']
    C = conv_dim[-1]
    posembs = [None] * (n - 1)
    for i in range(n - 1, 0, -1):
        W -= 2 * winpad
        kz, ky, kx = conv_sz[i]
        D, H, W = D * kz, H * ky, W * kx
        C = conv_dim[i - 1]
        W += 2 * winpad
        if cfg['sincos']:
            pe = _posemb_sincos_3d_np(D, H, W, C)
            posembs[i - 1] = jnp.asarray(pe.reshape(1, D, H, W, C),
                                         compute_dtype)

    # ---- surface-constant injection: fully precomputed constant tensor ----
    addl = _conv2d_patch_np(params['const_data'],
                            params['conv_addl_sfc']['w'],
                            params['conv_addl_sfc']['b'])      # (1,Hc,Wc,2C)
    _, Hc, Wc_, OC2 = addl.shape
    assert OC2 == 2 * C, (OC2, C)
    assert Hc == H and Wc_ == W - 2 * winpad, (Hc, Wc_, H, W)
    # TODO(synk): (2, C) split order assumed -- verify vs. the PyTorch view.
    addl = addl.reshape(1, Hc, Wc_, 2, C).transpose(0, 3, 1, 2, 4)
    addl = np.concatenate([addl[:, :, :, -winpad:], addl,
                           addl[:, :, :, :winpad]], axis=3)    # pad_lon
    return dict(deconvs=deconvs, heads=heads,
                addl=jnp.asarray(addl, compute_dtype),
                posembs=posembs)


# ----------------------------------------------------------------------------
# Plain-JAX glue matching the PyTorch helpers
# ----------------------------------------------------------------------------
def pad_lon(x, pad):
    # x: (B, D, H, W, C) -> circular longitude padding (left = last `pad`
    # columns, right = first `pad` columns).
    return jnp.concatenate([x[:, :, :, -pad:], x, x[:, :, :, :pad]], axis=3)


def transformer_identity(x):
    # TODO(synk): external config.Transformer blocks not available -> identity.
    return x


# ----------------------------------------------------------------------------
# Decoder forward (the forecaster head used by ForecastStepDiffusion.predict)
# ----------------------------------------------------------------------------
def forecast_step_udecoder_forward(x, prep, cfg):
    conv_sz = cfg['conv_sz']
    winpad_full = cfg['tr_win'][2] // 2 * 2          # self.winpad
    winpad = winpad_full // 2
    import_pad = cfg['window_size'][2] // 2 - winpad
    assert import_pad > 0

    B = x.shape[0]
    C = x.shape[-1]
    D, H, W = cfg['final_res']                       # transformers[-1].input_resolution
    W += 2 * import_pad
    x = x.reshape(B, D, H, W, C)[:, :, :, import_pad:-import_pad, :]
    W -= 2 * import_pad

    x = x.astype(jnp.bfloat16)                       # bf16 between all stages

    n = len(conv_sz)
    for i in range(n - 1, 0, -1):
        x = transformer_identity(x)                  # transformers[i]
        x = x[:, :, :, winpad:-winpad, :]            # crop lon pad, stay NDHWC
        x = conv_transpose_nd(x, prep['deconvs'][i - 1], out_dtype=jnp.bfloat16)
        x = pad_lon(x, winpad)
        if cfg['sincos']:
            x = x + prep['posembs'][i - 1]           # precomputed, bf16

    B, D, H, W, C = x.shape

    # x[:, -2:] += pad_lon(conv_addl_sfc(const_data)...)  -- fully precomputed
    x = x.at[:, -2:, :, :, :].add(prep['addl'])

    x = transformer_identity(x)                      # transformers[0]
    x = x[:, :, :, winpad:-winpad, :]
    W = W - 2 * winpad

    # --- fused final heads: one block-diagonal matmul for pr + sfc ---------
    hp = prep['heads']
    Kp, Ks = hp['k_pr'], hp['k_sfc']
    Mp_, Ms_ = hp['m_pr'], hp['m_sfc']

    x_pr = x[:, :-2]                                  # (B, D-2, H, W, C)
    x_sfc = jnp.transpose(x[:, -2:], (0, 2, 3, 1, 4)) # (B, H, W, 2, C): (lev, c)
    Np = B * (D - 2) * H * W
    Ns = B * H * W
    Xp = x_pr.reshape(Np, Kp)
    Xs = x_sfc.reshape(Ns, Ks)
    Xc = jnp.concatenate([
        jnp.concatenate([Xp, jnp.zeros((Np, Ks), Xp.dtype)], axis=1),
        jnp.concatenate([jnp.zeros((Ns, Kp), Xs.dtype), Xs], axis=1)], axis=0)
    Yc = matmul_bias(Xc, hp['Wm'], hp['b'], out_dtype=jnp.float32)

    kz, ky, kx = hp['pr_k']
    n_pr = hp['pr_oc']
    y_pr = Yc[:Np, :Mp_].reshape(B, D - 2, H, W, kz, ky, kx, n_pr)
    y_pr = jnp.transpose(y_pr, (0, 1, 4, 2, 5, 3, 6, 7))
    y_pr = y_pr.reshape(B, (D - 2) * kz, H * ky, W * kx, n_pr)  # (B,lev,lat,lon,npr)

    kh, kw = hp['sfc_k']
    n_sfc = hp['sfc_oc']
    y_sfc = Yc[Np:, Mp_:Mp_ + Ms_].reshape(B, H, W, kh, kw, n_sfc)
    y_sfc = jnp.transpose(y_sfc, (0, 1, 3, 2, 4, 5))
    y_sfc = y_sfc.reshape(B, H * kh, W * kw, n_sfc)             # (B,lat,lon,nsfc)
    # blend_conv = False in this synthetic config.

    y_pr = jnp.transpose(y_pr, (0, 2, 3, 4, 1))       # (B, lat, lon, n_pr, n_lev)
    y_pr = y_pr.reshape(B, y_pr.shape[1], y_pr.shape[2], -1)
    return jnp.concatenate([y_pr, y_sfc], axis=-1)


# ----------------------------------------------------------------------------
# Deterministic synthetic config + parameters
# ----------------------------------------------------------------------------
def make_config():
    cfg = dict(
        conv_sz=[(2, 2, 2), (2, 2, 2)],
        conv_dim=[16, 32],
        tr_win=(2, 2, 2),
        window_size=(2, 2, 4),
        sincos=True,
        n_pr_vars=4,
        n_levels=4,
        n_sfc_vars=5,
        n_lat=8,
        n_lon=16,
        n_const_vars=4,
        hidden_dim=32,
    )
    winpad_full = cfg['tr_win'][2] // 2 * 2
    res = (cfg['n_levels'] // cfg['conv_sz'][0][0] + 2,
           cfg['n_lat'] // cfg['conv_sz'][0][1],
           cfg['n_lon'] // cfg['conv_sz'][0][2] + winpad_full)
    for i in range(1, len(cfg['conv_sz'])):
        res = (res[0] // cfg['conv_sz'][i][0],
               res[1] // cfg['conv_sz'][i][1],
               (res[2] - winpad_full) // cfg['conv_sz'][i][2] + winpad_full)
    cfg['final_res'] = res
    assert cfg['conv_dim'][-1] == cfg['hidden_dim']
    return cfg


def init_params(key, cfg):
    keys = jax.random.split(key, 12)

    def w(k, shape, scale=0.02):
        return scale * jax.random.normal(k, shape, dtype=jnp.float32)

    cd, cs = cfg['conv_dim'], cfg['conv_sz']
    params = {}
    # deconvs[i]: ConvTranspose3d(in=cd[i+1], out=cd[i], k=cs[i+1])
    params['deconvs'] = []
    for i in range(len(cs) - 1):
        params['deconvs'].append({
            'w': w(keys[2 * i], (cd[i + 1], cd[i]) + tuple(cs[i + 1])),
            'b': w(keys[2 * i + 1], (cd[i],)),
        })
    # deconv_pr: ConvTranspose3d(in=cd[0], out=n_pr_vars, k=cs[0])
    params['deconv_pr'] = {
        'w': w(keys[4], (cd[0], cfg['n_pr_vars']) + tuple(cs[0])),
        'b': w(keys[5], (cfg['n_pr_vars'],)),
    }
    # deconv_sfc: ConvTranspose2d(in=cd[0]*2, out=n_sfc_vars, k=cs[0][1:])
    params['deconv_sfc'] = {
        'w': w(keys[6], (cd[0] * 2, cfg['n_sfc_vars']) + tuple(cs[0][1:])),
        'b': w(keys[7], (cfg['n_sfc_vars'],)),
    }
    # conv_addl_sfc: Conv2d(in=n_const_vars, out=cd[0]*2, k=cs[0][1:])
    params['conv_addl_sfc'] = {
        'w': w(keys[8], (cd[0] * 2, cfg['n_const_vars']) + tuple(cs[0][1:])),
        'b': w(keys[9], (cd[0] * 2,)),
    }
    # const_data: (1, n_const_vars, n_lat, n_lon)
    params['const_data'] = np.asarray(
        w(keys[10], (1, cfg['n_const_vars'], cfg['n_lat'], cfg['n_lon']),
          scale=1.0))
    return params


if __name__ == "__main__":
    cfg = make_config()
    key = jax.random.PRNGKey(0)
    k_in, k_par = jax.random.split(key)
    params = init_params(k_par, cfg)
    prep = prepare_params(params, cfg)
    _ = make_diffusion_schedule()          # ForecastStepDiffusion buffers

    # --- sanity checks of the Pallas matmul kernel --------------------------
    # single-block path, f32 tight / bf16 loose
    xa = jax.random.normal(jax.random.PRNGKey(1), (13, 32), jnp.float32)
    wa = jax.random.normal(jax.random.PRNGKey(2), (32, 20), jnp.float32)
    ba = jax.random.normal(jax.random.PRNGKey(3), (20,), jnp.float32)
    ref = xa @ wa + ba
    got_f32 = matmul_bias(xa, wa, ba, compute_dtype=jnp.float32)
    np.testing.assert_allclose(np.asarray(got_f32), np.asarray(ref),
                               rtol=1e-5, atol=1e-5)
    got_bf16 = matmul_bias(xa, wa, ba)
    np.testing.assert_allclose(np.asarray(got_bf16), np.asarray(ref),
                               rtol=5e-2, atol=3e-1)

    # row-tiled production path (grid, resident weight, parallel semantics)
    xb = jax.random.normal(jax.random.PRNGKey(4), (1024, 32), jnp.float32)
    wb = jax.random.normal(jax.random.PRNGKey(5), (32, 128), jnp.float32)
    bb = jax.random.normal(jax.random.PRNGKey(6), (128,), jnp.float32)
    refb = xb @ wb + bb
    gotb = matmul_bias(xb, wb, bb, tile_n=512)
    np.testing.assert_allclose(np.asarray(gotb), np.asarray(refb),
                               rtol=5e-2, atol=5e-1)

    # --- full decoder forward ------------------------------------------------
    winpad_full = cfg['tr_win'][2] // 2 * 2
    import_pad = cfg['window_size'][2] // 2 - winpad_full // 2
    D, H, W = cfg['final_res']
    n_tokens = D * H * (W + 2 * import_pad)
    x = jax.random.normal(k_in, (1, n_tokens, cfg['hidden_dim']),
                          dtype=jnp.float32)

    fwd = jax.jit(lambda xx: forecast_step_udecoder_forward(xx, prep, cfg))
    y = jax.block_until_ready(fwd(x))
    expected = (1, cfg['n_lat'], cfg['n_lon'],
                cfg['n_pr_vars'] * cfg['n_levels'] + cfg['n_sfc_vars'])
    assert y.shape == expected, (y.shape, expected)
    assert bool(jnp.all(jnp.isfinite(y)))
    print("KERNEL_OK")
</pallas_src>

<mosaic_0001>
module attributes {stable_mosaic.version = 11 : i64} {
  func.func @_matmul_bias_kernel(%arg0: memref<13x32xf32, #tpu.memory_space<vmem>>, %arg1: memref<32x20xf32, #tpu.memory_space<vmem>>, %arg2: memref<1x20xf32, #tpu.memory_space<vmem>>, %arg3: memref<13x20xf32, #tpu.memory_space<vmem>>) attributes {dimension_semantics = [], scalar_prefetch = 0 : i64, scratch_operands = 0 : i64, tpu.core_type = #tpu.core_type<tc>} {
    %c0 = arith.constant 0 : index
    %c0_0 = arith.constant 0 : index
    %0 = vector.load %arg0[%c0, %c0_0] : memref<13x32xf32, #tpu.memory_space<vmem>>, vector<13x32xf32>
    %c0_1 = arith.constant 0 : index
    %c0_2 = arith.constant 0 : index
    %1 = vector.load %arg1[%c0_1, %c0_2] : memref<32x20xf32, #tpu.memory_space<vmem>>, vector<32x20xf32>
    %cst = arith.constant dense<0.000000e+00> : vector<13x20xf32>
    %2 = tpu.matmul %0, %1, %cst {dimension_numbers = #tpu.dot_dimension_numbers<[1], [0], [0], [1], [0, 0, 1, 1], [], []>} : vector<13x32xf32>, vector<32x20xf32>, vector<13x20xf32> -> vector<13x20xf32>
    %c0_3 = arith.constant 0 : index
    %c0_4 = arith.constant 0 : index
    %3 = vector.load %arg2[%c0_3, %c0_4] : memref<1x20xf32, #tpu.memory_space<vmem>>, vector<1x20xf32>
    %4 = vector.broadcast %3 : vector<1x20xf32> to vector<13x20xf32>
    %5 = arith.addf %2, %4 : vector<13x20xf32>
    %c0_5 = arith.constant 0 : index
    %c0_6 = arith.constant 0 : index
    %6 = vector.load %arg3[%c0_5, %c0_6] : memref<13x20xf32, #tpu.memory_space<vmem>>, vector<13x20xf32>
    tpu.vector_store %arg3[%c0_5, %c0_6], %5 {strides = array<i32>} : memref<13x20xf32, #tpu.memory_space<vmem>>, vector<13x20xf32>,
    return
  }
}

</mosaic_0001>

<llo_original>
// kernel: tpu_custom_call.1
$region0: #{tpu_custom_call.1}
  #allocation0 [shape = 'u32[]', space=smem, size = 0x4, offset = 0x4, fixed_abs, tag = 'smem constant byte address 0x4 - core index']
  #allocation1 [shape = 'u32[144,128]{1,0:T(1,128)}', space=vmem, size = 0x12000, scoped, tag = 'internal scratch']
  %s0 = inlined_call_operand.vmem [shape: f32[13,32], index: 0, kind: input, shape index: {}]
  %s1 = inlined_call_operand.vmem [shape: f32[32,20], index: 1, kind: input, shape index: {}]
  %s2 = inlined_call_operand.vmem [shape: f32[1,20], index: 2, kind: input, shape index: {}]
  %s3 = inlined_call_operand.hbm [shape: f32[13,20], index: 3, kind: output, shape index: {}]
  %s4 = sld [smem:[#allocation0]]
  $region22: #{tpu_custom_call.1} parent=0
    _
  %s6 = ssub.s32 1, %s4
  %s7 = scalar_select 0, %s6, %s4
  $region1: #{tpu_custom_call.1} parent=0
    #allocation2 [shape = 'u8[8192]{0}', space=vmem, size = 0x2000, scoped, tag = 'output window, operand 0, single buffered']
    #allocation3 [shape = 's32[1]{0}', space=sflag, size = 0x4, scoped, tag = 'scoped memory for tpu_custom_call.1']
    %8 = vsyncpa [#allocation3], 0
    // Predicated region
    $region2: #{tpu_custom_call.1} parent=1 // pred_check
      _
    $region3: #{tpu_custom_call.1} parent=1 // pred_check_branch
      %10 = sbr.rel (0) target = $region5
    $region4: #{tpu_custom_call.1} parent=1 // pred_region
      _
    $region5: #{tpu_custom_call.1} parent=1 // pred_fallthru
      _
    // Predicated region
    $region6: #{tpu_custom_call.1} parent=1 // pred_check
      _
    $region7: #{tpu_custom_call.1} parent=1 // pred_check_branch
      %12 = sbr.rel (0) target = $region9
    $region8: #{tpu_custom_call.1} parent=1 // pred_region
      _
    $region9: #{tpu_custom_call.1} parent=1 // pred_fallthru
      _
    // Predicated region
    $region10: #{tpu_custom_call.1} parent=1 // pred_check
      _
    $region11: #{tpu_custom_call.1} parent=1 // pred_check_branch
      %14 = sbr.rel (0) target = $region13
    $region12: #{tpu_custom_call.1} parent=1 // pred_region
      _
    $region13: #{tpu_custom_call.1} parent=1 // pred_fallthru
      _
    %v15 = vld [vmem:[%s0] sm:$0xff]
    %v16 = vld [vmem:[%s0 + $0x8] sm:$0x1f]
    %v17 = vld [vmem:[%s1] sm:$0xff]
    %v18 = vld [vmem:[%s1 + $0x8] sm:$0xff]
    %v19 = vld [vmem:[%s1 + $0x10] sm:$0xff]
    %v20 = vld [vmem:[%s1 + $0x18] sm:$0xff]
    %v21 = vld [vmem:[%s2] sm:$0x1]
    %v23 = vlaneseq
    %v24 = vshrl.u32 %v23, 7
    %v25 = vsub.s32 0, %v24
    %v26 = vrot.slane %v21, %v25
    %vm28 = vcmask 261120
    %v30 = vsel %vm28, %v15, 0
    %v33 = vsel %vm28, %v16, 0
    %35 = vmatprep.subr.mxu0 0.0
    %36 = vmatpush1.msra.mxu0 %v17
    %37 = vmatprep.subr.mxu0 0.0
    %38 = vmatpush1.msra.mxu0 %v18
    %39 = vmatprep.subr.mxu0 0.0
    %40 = vmatpush1.msra.mxu0 %v19
    %41 = vmatprep.subr.mxu0 0.0
    %42 = vmatpush1.msra.mxu0 %v20
    %43 = vmatprep.subr.mxu0 0.0
    %44 = vmatpush1.msra.mxu0 0.0
    %45 = vmatprep.subr.mxu0 0.0
    %46 = vmatpush1.msra.mxu0 0.0
    %47 = vmatprep.subr.mxu0 0.0
    %48 = vmatpush1.msra.mxu0 0.0
    %49 = vmatprep.subr.mxu0 0.0
    %50 = vmatpush1.msra.mxu0 0.0
    %51 = vmatprep.subr.mxu0 0.0
    %52 = vmatpush1.msra.mxu0 0.0
    %53 = vmatprep.subr.mxu0 0.0
    %54 = vmatpush1.msra.mxu0 0.0
    %55 = vmatprep.subr.mxu0 0.0
    %56 = vmatpush1.msra.mxu0 0.0
    %57 = vmatprep.subr.mxu0 0.0
    %58 = vmatpush1.msra.mxu0 0.0
    %59 = vmatprep.subr.mxu0 0.0
    %60 = vmatpush1.msra.mxu0 0.0
    %61 = vmatprep.subr.mxu0 0.0
    %62 = vmatpush1.msra.mxu0 0.0
    %63 = vmatprep.subr.mxu0 0.0
    %64 = vmatpush1.msra.mxu0 0.0
    %65 = vmatprep.subr.mxu0 0.0
    %66 = vmatpush1.msra.mxu0 0.0
    %67 = vmatprep.subr.mxu0 0.0
    %68 = vmatpush1.msra.mxu0 0.0
    %69 = vmatprep.subr.mxu0 0.0
    %70 = vmatpush1.msra.mxu0 0.0
    %71 = vmatprep.subr.mxu0 0.0
    %72 = vmatpush1.msra.mxu0 0.0
    %73 = vmatprep.subr.mxu0 0.0
    %74 = vmatpush1.msra.mxu0 0.0
    %75 = vmatprep.subr.mxu0 0.0
    %76 = vmatpush1.msra.mxu0 0.0
    %77 = vmatprep.subr.mxu0 0.0
    %78 = vmatpush1.msra.mxu0 0.0
    %79 = vmatprep.subr.mxu0 0.0
    %80 = vmatpush1.msra.mxu0 0.0
    %81 = vmatprep.subr.mxu0 0.0
    %82 = vmatpush1.msra.mxu0 0.0
    %83 = vmatprep.subr.mxu0 0.0
    %84 = vmatpush1.msra.mxu0 0.0
    %85 = vmatprep.subr.mxu0 0.0
    %86 = vmatpush1.msra.mxu0 0.0
    %87 = vmatprep.subr.mxu0 0.0
    %88 = vmatpush1.msra.mxu0 0.0
    %89 = vmatprep.subr.mxu0 0.0
    %90 = vmatpush1.msra.mxu0 0.0
    %91 = vmatprep.subr.mxu0 0.0
    %92 = vmatpush1.msra.mxu0 0.0
    %93 = vmatprep.subr.mxu0 0.0
    %94 = vmatpush1.msra.mxu0 0.0
    %95 = vmatprep.subr.mxu0 0.0
    %96 = vmatpush1.msra.mxu0 0.0
    %97 = vmatprep.subr.mxu0 0.0
    %98 = vmatpush1.msra.mxu0 0.0
    %99 = vmatprep.mubr.f32.mxu0 0.0
    %100 = vmatmul.mubr.f32.gmra.mrb[0].mxu0 %v30
    %v101 = vpop.f32.mrb[0].mxu0
    %v102 = vadd.f32 %v26, %v101
    %v103 = vpop.f32.mrb[0].mxu0
    %104 = vmatprep.mubr.f32.mxu0 0.0
    %105 = vmatmul.mubr.f32.gmra.mrb[0].mxu0 %v33
    %v106 = vpop.f32.mrb[0].mxu0
    %v107 = vadd.f32 %v26, %v106
    %v108 = vpop.f32.mrb[0].mxu0
    %109 = vdwg.mxu0
    %vm110 = vcmask 162816
    %111 = vst.msk [vmem:[#allocation2] sm:$0xff] %vm110, %v102
    %vm112 = vcmask 159744
    %113 = vst.msk [vmem:[#allocation2 + $0x8] sm:$0x1f] %vm112, %v107
    // Predicated region
    $region14: #{tpu_custom_call.1} parent=1 // pred_check
      _
    $region15: #{tpu_custom_call.1} parent=1 // pred_check_branch
      %115 = sbr.rel (0) target = $region17
    $region16: #{tpu_custom_call.1} parent=1 // pred_region
      %s117 = ssub.s32 256, 256
      %118 = vsyncadd [#allocation3], %s117
      %s119 = sshll.u32 [#allocation2], 4
      %s120 = int_to_ptr.vmem [resolvable:$true] %s119
      %125 = dma.vmem_to_hbm [thread:$0]  %s120, 256, %s3, [#allocation3], 128, 128, 8
    $region17: #{tpu_custom_call.1} parent=1 // pred_fallthru
      _
    // Predicated region
    $region18: #{tpu_custom_call.1} parent=1 // pred_check
      _
    $region19: #{tpu_custom_call.1} parent=1 // pred_check_branch
      %127 = sbr.rel (0) target = $region21
    $region20: #{tpu_custom_call.1} parent=1 // pred_region
      %128 = dma.done [#allocation3], 256
    $region21: #{tpu_custom_call.1} parent=1 // pred_fallthru
      _
    %129 = vsyncpa [#allocation3], 1

</llo_original>
